<compile_context>
chip_gen: v7x
topology: tpu7x:2x2x1
jax: 0.10.0
libtpu: 0.0.40
codegen_flags: <defaults>
</compile_context>

<pallas_src>
import math
from functools import partial

import jax
import jax.numpy as jnp
import numpy as np
from jax.experimental import pallas as pl
from jax.experimental.pallas import tpu as pltpu


# ---------------------------------------------------------------------------
# Sizes & packed-parameter slab layout
# ---------------------------------------------------------------------------
IN_DIM = 6
HID = 64
OUT_DIM = 4

IN_PAD = 8       # x columns: 6 features | ones column | zero column
OUT_PAD = 8      # kernel output lanes: 4 Q-values | 4 zero lanes
LANES = 128      # lane-dense width of the parameter slab
ONE_COL = IN_DIM      # column 6 of x carries the constant 1 (bias folding)
BIAS_LANE = HID       # lane 64 of h1/h2 carries the constant 1 forward

# Slab layout (rows x 128 lanes). Every block starts on a 16-row boundary and
# has a 16-multiple row count, so static slices are tile-aligned for both f32
# (8,128) and bf16 (16,128) layouts.
_W1_R0, _W1_R1 = 0, 8        # (8,128):  rows 0..5 = w1, row 6 = [b1 | 1@lane64]
_W2_R0, _W2_R1 = 16, 144     # (128,128): rows 0..63 = w2_eff, row 64 = [b2 | 1@lane64]
_W3_R0, _W3_R1 = 144, 272    # (128,128): rows 0..63 = w3_eff, row 64 = [b3]
SLAB_ROWS = 272              # 272 * 128 * 4 B = 136 KiB (f32), 68 KiB (bf16)


# ---------------------------------------------------------------------------
# Pallas kernel: 3 MXU matmuls + 2 ReLUs, biases folded via the ones lane,
# narrow (TB, 8) lane store for the Q-values.
# ---------------------------------------------------------------------------
def _noisy_dqn_kernel(x_ref, p_ref, out_ref):
    x = x_ref[...]                           # (TB, 8): [features | 1 | 0]
    w1 = p_ref[_W1_R0:_W1_R1, :]             # (8, 128)
    w2 = p_ref[_W2_R0:_W2_R1, :]             # (128, 128)
    w3 = p_ref[_W3_R0:_W3_R1, :]             # (128, 128)
    cdt = w1.dtype                           # compute dtype (f32 or bf16)

    # Layer 1: Linear(6,64)+bias+ReLU. Lane 64 of h1 becomes exactly 1.0.
    h1 = jnp.maximum(jnp.dot(x, w1, preferred_element_type=jnp.float32), 0.0)
    # Layer 2: NoisyLinear(64,64)+bias+ReLU (effective weight precomputed).
    h2 = jnp.maximum(
        jnp.dot(h1.astype(cdt), w2, preferred_element_type=jnp.float32), 0.0)
    # Layer 3: NoisyLinear(64,4)+bias; only 8 lanes are stored back to HBM.
    q = jnp.dot(h2.astype(cdt), w3, preferred_element_type=jnp.float32)
    out_ref[...] = q[:, :OUT_PAD].astype(out_ref.dtype)


def _cdiv(a, b):
    return -(-a // b)


def _round_up(v, m):
    return _cdiv(v, m) * m


@partial(jax.jit, static_argnames=("max_block", "min_split_batch", "padded_output"))
def noisy_dqn_forward(x, slab, *, max_block=2048, min_split_batch=512,
                      padded_output=False):
    """Forward pass. `slab` is the packed effective-parameter slab (rebuilt only
    on reset_noise()/parameter updates, not per forward)."""
    B = x.shape[0]
    dtype = slab.dtype
    row_align = 32 // jnp.dtype(dtype).itemsize   # 8 for f32, 16 for bf16

    # Balanced tiles; >=2 tiles for large batches so the "parallel" batch axis
    # can shard across both TensorCores on v7x (one extra, cheap sequential
    # grid step on single-TC v5e/v6e).
    n_tiles = _cdiv(B, max_block)
    if B >= min_split_batch:
        n_tiles = max(n_tiles, 2)
    tb = _round_up(_cdiv(B, n_tiles), row_align)
    b_pad = n_tiles * tb

    # Augment x with the ones column (bias folding) and pad rows/cols; under
    # jit this is a single fused materialization feeding the pallas_call.
    pad_cols = IN_PAD - IN_DIM - 1
    x_aug = jnp.concatenate(
        [x.astype(dtype),
         jnp.ones((B, 1), dtype),
         jnp.zeros((B, pad_cols), dtype)], axis=1)
    x_pad = jnp.pad(x_aug, ((0, b_pad - B), (0, 0)))

    out = pl.pallas_call(
        _noisy_dqn_kernel,
        out_shape=jax.ShapeDtypeStruct((b_pad, OUT_PAD), jnp.float32),
        grid=(n_tiles,),
        in_specs=[
            pl.BlockSpec((tb, IN_PAD), lambda i: (i, 0)),        # batch tile
            pl.BlockSpec((SLAB_ROWS, LANES), lambda i: (0, 0)),  # resident weights
        ],
        out_specs=pl.BlockSpec((tb, OUT_PAD), lambda i: (i, 0)),
        compiler_params=pltpu.CompilerParams(
            dimension_semantics=("parallel",),                   # v7x: 2 TCs split batch
        ),
    )(x_pad, slab)

    if padded_output:
        return out                      # (b_pad, 8); consumers slice lanes 0..3
    return out[:B, :OUT_DIM]


# ---------------------------------------------------------------------------
# Once-per-reset_noise(): fold factorized noise + biases into the slab
# (plain XLA, outside the hot path).
# ---------------------------------------------------------------------------
def build_param_slab(p, dtype=jnp.float32):
    # Weights are kept in (in, out) layout; outer(eps_in, eps_out)[i, o] equals
    # PyTorch's ger(eps_out, eps_in).T, so x @ W here == F.linear(x, W_pt).
    w2 = p["w2_mu"] + p["w2_sigma"] * (p["e2_in"][:, None] * p["e2_out"][None, :])
    b2 = p["b2_mu"] + p["b2_sigma"] * p["b2_eps"]
    w3 = p["w3_mu"] + p["w3_sigma"] * (p["e3_in"][:, None] * p["e3_out"][None, :])
    b3 = p["b3_mu"] + p["b3_sigma"] * p["b3_eps"]

    slab = jnp.zeros((SLAB_ROWS, LANES), jnp.float32)
    # Layer 1 block: weight rows, bias row, and the "carry the 1" lane.
    slab = slab.at[_W1_R0:_W1_R0 + IN_DIM, 0:HID].set(p["w1"])
    slab = slab.at[_W1_R0 + ONE_COL, 0:HID].set(p["b1"])
    slab = slab.at[_W1_R0 + ONE_COL, BIAS_LANE].set(1.0)
    # Layer 2 block.
    slab = slab.at[_W2_R0:_W2_R0 + HID, 0:HID].set(w2)
    slab = slab.at[_W2_R0 + BIAS_LANE, 0:HID].set(b2)
    slab = slab.at[_W2_R0 + BIAS_LANE, BIAS_LANE].set(1.0)
    # Layer 3 block.
    slab = slab.at[_W3_R0:_W3_R0 + HID, 0:OUT_DIM].set(w3)
    slab = slab.at[_W3_R0 + BIAS_LANE, 0:OUT_DIM].set(b3)
    return slab.astype(dtype)


# ---------------------------------------------------------------------------
# Deterministic parameter / noise init (mirrors the PyTorch module's rules)
# ---------------------------------------------------------------------------
def _scale_noise(key, size):
    # PyTorch: x ~ N(0,1); return sign(x) * sqrt(|x|)
    x = jax.random.normal(key, (size,), dtype=jnp.float32)
    return jnp.sign(x) * jnp.sqrt(jnp.abs(x))


def init_params(key):
    ks = jax.random.split(key, 11)
    p = {}

    # Linear(6, 64): xavier_uniform weight, zero bias (module constructor).
    bound1 = math.sqrt(6.0 / (IN_DIM + HID))
    p["w1"] = jax.random.uniform(ks[0], (IN_DIM, HID), jnp.float32, -bound1, bound1)
    p["b1"] = jnp.zeros((HID,), jnp.float32)

    # NoisyLinear(64, 64): mu ~ U(+/-sqrt(3/in)); weight_sigma = 0.5/sqrt(in),
    # bias_sigma = 0.5/sqrt(out) (spec's reset_parameters).
    std2 = math.sqrt(3.0 / HID)
    p["w2_mu"] = jax.random.uniform(ks[1], (HID, HID), jnp.float32, -std2, std2)
    p["b2_mu"] = jax.random.uniform(ks[2], (HID,), jnp.float32, -std2, std2)
    p["w2_sigma"] = jnp.full((HID, HID), 0.5 / math.sqrt(HID), jnp.float32)
    p["b2_sigma"] = jnp.full((HID,), 0.5 / math.sqrt(HID), jnp.float32)   # out=64
    p["e2_in"] = _scale_noise(ks[3], HID)
    p["e2_out"] = _scale_noise(ks[4], HID)
    # bias_epsilon is an independent _scale_noise(out) draw per the spec's
    # reset_noise() (NOT a copy of epsilon_output).
    p["b2_eps"] = _scale_noise(ks[5], HID)

    # NoisyLinear(64, 4)
    std3 = math.sqrt(3.0 / HID)
    p["w3_mu"] = jax.random.uniform(ks[6], (HID, OUT_DIM), jnp.float32, -std3, std3)
    p["b3_mu"] = jax.random.uniform(ks[7], (OUT_DIM,), jnp.float32, -std3, std3)
    p["w3_sigma"] = jnp.full((HID, OUT_DIM), 0.5 / math.sqrt(HID), jnp.float32)
    p["b3_sigma"] = jnp.full((OUT_DIM,), 0.5 / math.sqrt(OUT_DIM), jnp.float32)
    p["e3_in"] = _scale_noise(ks[8], HID)
    p["e3_out"] = _scale_noise(ks[9], OUT_DIM)
    p["b3_eps"] = _scale_noise(ks[10], OUT_DIM)

    return p


# ---------------------------------------------------------------------------
# Pure-JAX reference (mirrors the PyTorch training-mode forward exactly)
# ---------------------------------------------------------------------------
def reference_forward(x, p):
    h1 = jnp.maximum(x @ p["w1"] + p["b1"], 0.0)
    w2 = p["w2_mu"] + p["w2_sigma"] * (p["e2_in"][:, None] * p["e2_out"][None, :])
    b2 = p["b2_mu"] + p["b2_sigma"] * p["b2_eps"]
    h2 = jnp.maximum(h1 @ w2 + b2, 0.0)
    w3 = p["w3_mu"] + p["w3_sigma"] * (p["e3_in"][:, None] * p["e3_out"][None, :])
    b3 = p["b3_mu"] + p["b3_sigma"] * p["b3_eps"]
    return h2 @ w3 + b3


if __name__ == "__main__":
    key = jax.random.PRNGKey(0)
    k_params, k_x1, k_x2 = jax.random.split(key, 3)

    params = init_params(k_params)
    slab = build_param_slab(params)   # f32 slab; rebuilt only on reset_noise()

    # Small batch (state dim = 6, 4 Q-values) -> single tile, grid=(1,).
    x_small = jax.random.normal(k_x1, (8, IN_DIM), dtype=jnp.float32)
    out_small = jax.block_until_ready(noisy_dqn_forward(x_small, slab))
    ref_small = reference_forward(x_small, params)
    assert out_small.shape == (8, OUT_DIM)
    np.testing.assert_allclose(np.asarray(out_small), np.asarray(ref_small),
                               rtol=1e-5, atol=1e-5)

    # Larger batch -> 2 balanced tiles of 304 rows (b_pad=608, vs 512-row
    # padding in v1); exercises the multi-tile / parallel batch axis.
    x_big = jax.random.normal(k_x2, (600, IN_DIM), dtype=jnp.float32)
    out_big = jax.block_until_ready(noisy_dqn_forward(x_big, slab))
    ref_big = reference_forward(x_big, params)
    assert out_big.shape == (600, OUT_DIM)
    np.testing.assert_allclose(np.asarray(out_big), np.asarray(ref_big),
                               rtol=1e-5, atol=1e-5)

    # Optional bf16 parameter slab (v6e/v7x suggestion): half the resident
    # bytes, single-pass bf16 MXU matmuls, f32 accumulation. Looser tolerance
    # vs the f32 reference.
    slab_bf16 = build_param_slab(params, dtype=jnp.bfloat16)
    out_bf16 = jax.block_until_ready(noisy_dqn_forward(x_big, slab_bf16))
    np.testing.assert_allclose(np.asarray(out_bf16), np.asarray(ref_big),
                               rtol=1e-1, atol=5e-2)

    print("KERNEL_OK")
</pallas_src>

<mosaic_0001>
module attributes {stable_mosaic.version = 11 : i64} {
  func.func @_noisy_dqn_kernel(%arg0: i32, %arg1: memref<8x8xf32, #tpu.memory_space<vmem>>, %arg2: memref<272x128xf32, #tpu.memory_space<vmem>>, %arg3: memref<8x8xf32, #tpu.memory_space<vmem>>) attributes {dimension_semantics = [#tpu.dimension_semantics<parallel>], iteration_bounds = array<i64: 1>, scalar_prefetch = 0 : i64, scratch_operands = 0 : i64, tpu.core_type = #tpu.core_type<tc>, window_params = [{transform_indices = @transform_0, window_bounds = array<i64: 8, 8>}, {pipeline_mode = #tpu.pipeline_mode<synchronous>, transform_indices = @transform_1, window_bounds = array<i64: 272, 128>}, {transform_indices = @transform_2, window_bounds = array<i64: 8, 8>}]} {
    %c0 = arith.constant 0 : index
    %c0_0 = arith.constant 0 : index
    %0 = vector.load %arg1[%c0, %c0_0] : memref<8x8xf32, #tpu.memory_space<vmem>>, vector<8x8xf32>
    %c0_1 = arith.constant 0 : index
    %c0_2 = arith.constant 0 : index
    %1 = vector.load %arg2[%c0_1, %c0_2] : memref<272x128xf32, #tpu.memory_space<vmem>>, vector<8x128xf32>
    %c16 = arith.constant 16 : index
    %c0_3 = arith.constant 0 : index
    %2 = vector.load %arg2[%c16, %c0_3] : memref<272x128xf32, #tpu.memory_space<vmem>>, vector<128x128xf32>
    %c144 = arith.constant 144 : index
    %c0_4 = arith.constant 0 : index
    %3 = vector.load %arg2[%c144, %c0_4] : memref<272x128xf32, #tpu.memory_space<vmem>>, vector<128x128xf32>
    %cst = arith.constant dense<0.000000e+00> : vector<8x128xf32>
    %4 = tpu.matmul %0, %1, %cst {dimension_numbers = #tpu.dot_dimension_numbers<[1], [0], [0], [1], [0, 0, 1, 1], [], []>} : vector<8x8xf32>, vector<8x128xf32>, vector<8x128xf32> -> vector<8x128xf32>
    %cst_5 = arith.constant 0.000000e+00 : f32
    %5 = vector.broadcast %cst_5 : f32 to vector<8x128xf32>
    %6 = arith.maximumf %4, %5 : vector<8x128xf32>
    %cst_6 = arith.constant dense<0.000000e+00> : vector<8x128xf32>
    %7 = tpu.matmul %6, %2, %cst_6 {dimension_numbers = #tpu.dot_dimension_numbers<[1], [0], [0], [1], [0, 0, 1, 1], [], []>} : vector<8x128xf32>, vector<128x128xf32>, vector<8x128xf32> -> vector<8x128xf32>
    %cst_7 = arith.constant 0.000000e+00 : f32
    %8 = vector.broadcast %cst_7 : f32 to vector<8x128xf32>
    %9 = arith.maximumf %7, %8 : vector<8x128xf32>
    %cst_8 = arith.constant dense<0.000000e+00> : vector<8x128xf32>
    %10 = tpu.matmul %9, %3, %cst_8 {dimension_numbers = #tpu.dot_dimension_numbers<[1], [0], [0], [1], [0, 0, 1, 1], [], []>} : vector<8x128xf32>, vector<128x128xf32>, vector<8x128xf32> -> vector<8x128xf32>
    %11 = vector.extract_strided_slice %10 {offsets = [0, 0], sizes = [8, 8], strides = [1, 1]} : vector<8x128xf32> to vector<8x8xf32>
    %c0_9 = arith.constant 0 : index
    %c0_10 = arith.constant 0 : index
    %12 = vector.load %arg3[%c0_9, %c0_10] : memref<8x8xf32, #tpu.memory_space<vmem>>, vector<8x8xf32>
    tpu.vector_store %arg3[%c0_9, %c0_10], %11 {strides = array<i32>} : memref<8x8xf32, #tpu.memory_space<vmem>>, vector<8x8xf32>,
    return
  }
  func.func @transform_0(%arg0: i32) -> (i32, i32) {
    %c0_i32 = arith.constant 0 : i32
    %c0_i32_0 = arith.constant 0 : i32
    return %arg0, %c0_i32 : i32, i32
  }
  func.func @transform_1(%arg0: i32) -> (i32, i32) {
    %c0_i32 = arith.constant 0 : i32
    %c0_i32_0 = arith.constant 0 : i32
    %c0_i32_1 = arith.constant 0 : i32
    return %c0_i32, %c0_i32_0 : i32, i32
  }
  func.func @transform_2(%arg0: i32) -> (i32, i32) {
    %c0_i32 = arith.constant 0 : i32
    %c0_i32_0 = arith.constant 0 : i32
    return %arg0, %c0_i32 : i32, i32
  }
}

</mosaic_0001>

<llo_original>
// kernel: noisy_dqn_forward.1
$region0: #{noisy_dqn_forward.1}
  #allocation0 [shape = 'u32[]', space=smem, size = 0x4, offset = 0x4, fixed_abs, tag = 'smem constant byte address 0x4 - core index']
  #allocation1 [shape = 'u32[144,128]{1,0:T(1,128)}', space=vmem, size = 0x12000, scoped, tag = 'internal scratch']
  %s0 = inlined_call_operand.vmem [shape: f32[8,8], index: 0, kind: input, shape index: {}]
  %s1 = inlined_call_operand.hbm [shape: f32[272,128], index: 1, kind: input, shape index: {}]
  %s2 = inlined_call_operand.vmem [shape: f32[8,8], index: 2, kind: output, shape index: {}]
  %s3 = sld [smem:[#allocation0]]
  $region22: #{noisy_dqn_forward.1} parent=0
    _
  %s5 = ssub.s32 1, %s3
  %s6 = scalar_select 0, %s5, %s3
  $region1: #{noisy_dqn_forward.1} parent=0
    #allocation2 [shape = 'u8[139264]{0}', space=vmem, size = 0x22000, scoped, tag = 'input window, operand 1, single buffered']
    #allocation3 [shape = 's32[1]{0}', space=sflag, size = 0x4, scoped, tag = 'scoped memory for noisy_dqn_forward.1']
    %7 = vsyncpa [#allocation3], 0
    // Predicated region
    $region2: #{noisy_dqn_forward.1} parent=1 // pred_check
      _
    $region3: #{noisy_dqn_forward.1} parent=1 // pred_check_branch
      %9 = sbr.rel (0) target = $region5
    $region4: #{noisy_dqn_forward.1} parent=1 // pred_region
      _
    $region5: #{noisy_dqn_forward.1} parent=1 // pred_fallthru
      _
    // Predicated region
    $region6: #{noisy_dqn_forward.1} parent=1 // pred_check
      _
    $region7: #{noisy_dqn_forward.1} parent=1 // pred_check_branch
      %11 = sbr.rel (0) target = $region9
    $region8: #{noisy_dqn_forward.1} parent=1 // pred_region
      %s13 = ssub.s32 4352, 4352
      %14 = vsyncadd [#allocation3], %s13
      %s15 = sshll.u32 [#allocation2], 4
      %s16 = int_to_ptr.vmem [resolvable:$true] %s15
      %21 = dma.hbm_to_vmem [thread:$0]  %s1, 4352, %s16, [#allocation3], 128, 128, 8
    $region9: #{noisy_dqn_forward.1} parent=1 // pred_fallthru
      _
    // Predicated region
    $region10: #{noisy_dqn_forward.1} parent=1 // pred_check
      _
    $region11: #{noisy_dqn_forward.1} parent=1 // pred_check_branch
      %23 = sbr.rel (0) target = $region13
    $region12: #{noisy_dqn_forward.1} parent=1 // pred_region
      %24 = dma.done [#allocation3], 4352
    $region13: #{noisy_dqn_forward.1} parent=1 // pred_fallthru
      _
    %v25 = vld [vmem:[%s0] sm:$0xff]
    %v26 = vld [vmem:[#allocation2] sm:$0xff]
    %v27 = vld [vmem:[#allocation2 + $0x10] sm:$0xff]
    %v28 = vld [vmem:[#allocation2 + $0x18] sm:$0xff]
    %v29 = vld [vmem:[#allocation2 + $0x20] sm:$0xff]
    %v30 = vld [vmem:[#allocation2 + $0x28] sm:$0xff]
    %v31 = vld [vmem:[#allocation2 + $0x30] sm:$0xff]
    %v32 = vld [vmem:[#allocation2 + $0x38] sm:$0xff]
    %v33 = vld [vmem:[#allocation2 + $0x40] sm:$0xff]
    %v34 = vld [vmem:[#allocation2 + $0x48] sm:$0xff]
    %v35 = vld [vmem:[#allocation2 + $0x50] sm:$0xff]
    %v36 = vld [vmem:[#allocation2 + $0x58] sm:$0xff]
    %v37 = vld [vmem:[#allocation2 + $0x60] sm:$0xff]
    %v38 = vld [vmem:[#allocation2 + $0x68] sm:$0xff]
    %v39 = vld [vmem:[#allocation2 + $0x70] sm:$0xff]
    %v40 = vld [vmem:[#allocation2 + $0x78] sm:$0xff]
    %v41 = vld [vmem:[#allocation2 + $0x80] sm:$0xff]
    %v42 = vld [vmem:[#allocation2 + $0x88] sm:$0xff]
    %v43 = vld [vmem:[#allocation2 + $0x90] sm:$0xff]
    %v44 = vld [vmem:[#allocation2 + $0x98] sm:$0xff]
    %v45 = vld [vmem:[#allocation2 + $0xa0] sm:$0xff]
    %v46 = vld [vmem:[#allocation2 + $0xa8] sm:$0xff]
    %v47 = vld [vmem:[#allocation2 + $0xb0] sm:$0xff]
    %v48 = vld [vmem:[#allocation2 + $0xb8] sm:$0xff]
    %v49 = vld [vmem:[#allocation2 + $0xc0] sm:$0xff]
    %v50 = vld [vmem:[#allocation2 + $0xc8] sm:$0xff]
    %v51 = vld [vmem:[#allocation2 + $0xd0] sm:$0xff]
    %v52 = vld [vmem:[#allocation2 + $0xd8] sm:$0xff]
    %v53 = vld [vmem:[#allocation2 + $0xe0] sm:$0xff]
    %v54 = vld [vmem:[#allocation2 + $0xe8] sm:$0xff]
    %v55 = vld [vmem:[#allocation2 + $0xf0] sm:$0xff]
    %v56 = vld [vmem:[#allocation2 + $0xf8] sm:$0xff]
    %v57 = vld [vmem:[#allocation2 + $0x100] sm:$0xff]
    %v58 = vld [vmem:[#allocation2 + $0x108] sm:$0xff]
    %vm59 = vcmask 64512
    %v61 = vsel %vm59, %v25, 0
    %63 = vmatprep.subr.mxu0 0.0
    %64 = vmatpush1.msra.mxu0 %v26
    %65 = vmatprep.subr.mxu0 0.0
    %66 = vmatpush1.msra.mxu0 0.0
    %67 = vmatprep.subr.mxu0 0.0
    %68 = vmatpush1.msra.mxu0 0.0
    %69 = vmatprep.subr.mxu0 0.0
    %70 = vmatpush1.msra.mxu0 0.0
    %71 = vmatprep.subr.mxu0 0.0
    %72 = vmatpush1.msra.mxu0 0.0
    %73 = vmatprep.subr.mxu0 0.0
    %74 = vmatpush1.msra.mxu0 0.0
    %75 = vmatprep.subr.mxu0 0.0
    %76 = vmatpush1.msra.mxu0 0.0
    %77 = vmatprep.subr.mxu0 0.0
    %78 = vmatpush1.msra.mxu0 0.0
    %79 = vmatprep.subr.mxu0 0.0
    %80 = vmatpush1.msra.mxu0 0.0
    %81 = vmatprep.subr.mxu0 0.0
    %82 = vmatpush1.msra.mxu0 0.0
    %83 = vmatprep.subr.mxu0 0.0
    %84 = vmatpush1.msra.mxu0 0.0
    %85 = vmatprep.subr.mxu0 0.0
    %86 = vmatpush1.msra.mxu0 0.0
    %87 = vmatprep.subr.mxu0 0.0
    %88 = vmatpush1.msra.mxu0 0.0
    %89 = vmatprep.subr.mxu0 0.0
    %90 = vmatpush1.msra.mxu0 0.0
    %91 = vmatprep.subr.mxu0 0.0
    %92 = vmatpush1.msra.mxu0 0.0
    %93 = vmatprep.subr.mxu0 0.0
    %94 = vmatpush1.msra.mxu0 0.0
    %95 = vmatprep.subr.mxu0 0.0
    %96 = vmatpush1.msra.mxu0 0.0
    %97 = vmatprep.subr.mxu0 0.0
    %98 = vmatpush1.msra.mxu0 0.0
    %99 = vmatprep.subr.mxu0 0.0
    %100 = vmatpush1.msra.mxu0 0.0
    %101 = vmatprep.subr.mxu0 0.0
    %102 = vmatpush1.msra.mxu0 0.0
    %103 = vmatprep.subr.mxu0 0.0
    %104 = vmatpush1.msra.mxu0 0.0
    %105 = vmatprep.subr.mxu0 0.0
    %106 = vmatpush1.msra.mxu0 0.0
    %107 = vmatprep.subr.mxu0 0.0
    %108 = vmatpush1.msra.mxu0 0.0
    %109 = vmatprep.subr.mxu0 0.0
    %110 = vmatpush1.msra.mxu0 0.0
    %111 = vmatprep.subr.mxu0 0.0
    %112 = vmatpush1.msra.mxu0 0.0
    %113 = vmatprep.subr.mxu0 0.0
    %114 = vmatpush1.msra.mxu0 0.0
    %115 = vmatprep.subr.mxu0 0.0
    %116 = vmatpush1.msra.mxu0 0.0
    %117 = vmatprep.subr.mxu0 0.0
    %118 = vmatpush1.msra.mxu0 0.0
    %119 = vmatprep.subr.mxu0 0.0
    %120 = vmatpush1.msra.mxu0 0.0
    %121 = vmatprep.subr.mxu0 0.0
    %122 = vmatpush1.msra.mxu0 0.0
    %123 = vmatprep.subr.mxu0 0.0
    %124 = vmatpush1.msra.mxu0 0.0
    %125 = vmatprep.subr.mxu0 0.0
    %126 = vmatpush1.msra.mxu0 0.0
    %127 = vmatprep.mubr.f32.mxu0 0.0
    %128 = vmatmul.mubr.f32.gmra.mrb[0].mxu0 %v61
    %v129 = vpop.f32.mrb[0].mxu0
    %v130 = vadd.f32 0.0, %v129
    %v131 = vpop.f32.mrb[0].mxu0
    %132 = vdwg.mxu0
    %v133 = vmax.f32 %v130, 0.0
    %134 = vmatprep.subr.mxu0 0.0
    %135 = vmatpush1.msra.mxu0 %v27
    %136 = vmatprep.subr.mxu0 0.0
    %137 = vmatpush1.msra.mxu0 %v28
    %138 = vmatprep.subr.mxu0 0.0
    %139 = vmatpush1.msra.mxu0 %v29
    %140 = vmatprep.subr.mxu0 0.0
    %141 = vmatpush1.msra.mxu0 %v30
    %142 = vmatprep.subr.mxu0 0.0
    %143 = vmatpush1.msra.mxu0 %v31
    %144 = vmatprep.subr.mxu0 0.0
    %145 = vmatpush1.msra.mxu0 %v32
    %146 = vmatprep.subr.mxu0 0.0
    %147 = vmatpush1.msra.mxu0 %v33
    %148 = vmatprep.subr.mxu0 0.0
    %149 = vmatpush1.msra.mxu0 %v34
    %150 = vmatprep.subr.mxu0 0.0
    %151 = vmatpush1.msra.mxu0 %v35
    %152 = vmatprep.subr.mxu0 0.0
    %153 = vmatpush1.msra.mxu0 %v36
    %154 = vmatprep.subr.mxu0 0.0
    %155 = vmatpush1.msra.mxu0 %v37
    %156 = vmatprep.subr.mxu0 0.0
    %157 = vmatpush1.msra.mxu0 %v38
    %158 = vmatprep.subr.mxu0 0.0
    %159 = vmatpush1.msra.mxu0 %v39
    %160 = vmatprep.subr.mxu0 0.0
    %161 = vmatpush1.msra.mxu0 %v40
    %162 = vmatprep.subr.mxu0 0.0
    %163 = vmatpush1.msra.mxu0 %v41
    %164 = vmatprep.subr.mxu0 0.0
    %165 = vmatpush1.msra.mxu0 %v42
    %166 = vmatprep.subr.mxu0 0.0
    %167 = vmatpush1.msra.mxu0 0.0
    %168 = vmatprep.subr.mxu0 0.0
    %169 = vmatpush1.msra.mxu0 0.0
    %170 = vmatprep.subr.mxu0 0.0
    %171 = vmatpush1.msra.mxu0 0.0
    %172 = vmatprep.subr.mxu0 0.0
    %173 = vmatpush1.msra.mxu0 0.0
    %174 = vmatprep.subr.mxu0 0.0
    %175 = vmatpush1.msra.mxu0 0.0
    %176 = vmatprep.subr.mxu0 0.0
    %177 = vmatpush1.msra.mxu0 0.0
    %178 = vmatprep.subr.mxu0 0.0
    %179 = vmatpush1.msra.mxu0 0.0
    %180 = vmatprep.subr.mxu0 0.0
    %181 = vmatpush1.msra.mxu0 0.0
    %182 = vmatprep.subr.mxu0 0.0
    %183 = vmatpush1.msra.mxu0 0.0
    %184 = vmatprep.subr.mxu0 0.0
    %185 = vmatpush1.msra.mxu0 0.0
    %186 = vmatprep.subr.mxu0 0.0
    %187 = vmatpush1.msra.mxu0 0.0
    %188 = vmatprep.subr.mxu0 0.0
    %189 = vmatpush1.msra.mxu0 0.0
    %190 = vmatprep.subr.mxu0 0.0
    %191 = vmatpush1.msra.mxu0 0.0
    %192 = vmatprep.subr.mxu0 0.0
    %193 = vmatpush1.msra.mxu0 0.0
    %194 = vmatprep.subr.mxu0 0.0
    %195 = vmatpush1.msra.mxu0 0.0
    %196 = vmatprep.subr.mxu0 0.0
    %197 = vmatpush1.msra.mxu0 0.0
    %198 = vmatprep.mubr.f32.mxu0 0.0
    %199 = vmatmul.mubr.f32.gmra.mrb[0].mxu0 %v133
    %v200 = vpop.f32.mrb[0].mxu0
    %v201 = vadd.f32 0.0, %v200
    %v202 = vpop.f32.mrb[0].mxu0
    %203 = vdwg.mxu0
    %v204 = vmax.f32 %v201, 0.0
    %205 = vmatprep.subr.mxu0 0.0
    %206 = vmatpush1.msra.mxu0 %v43
    %207 = vmatprep.subr.mxu0 0.0
    %208 = vmatpush1.msra.mxu0 %v44
    %209 = vmatprep.subr.mxu0 0.0
    %210 = vmatpush1.msra.mxu0 %v45
    %211 = vmatprep.subr.mxu0 0.0
    %212 = vmatpush1.msra.mxu0 %v46
    %213 = vmatprep.subr.mxu0 0.0
    %214 = vmatpush1.msra.mxu0 %v47
    %215 = vmatprep.subr.mxu0 0.0
    %216 = vmatpush1.msra.mxu0 %v48
    %217 = vmatprep.subr.mxu0 0.0
    %218 = vmatpush1.msra.mxu0 %v49
    %219 = vmatprep.subr.mxu0 0.0
    %220 = vmatpush1.msra.mxu0 %v50
    %221 = vmatprep.subr.mxu0 0.0
    %222 = vmatpush1.msra.mxu0 %v51
    %223 = vmatprep.subr.mxu0 0.0
    %224 = vmatpush1.msra.mxu0 %v52
    %225 = vmatprep.subr.mxu0 0.0
    %226 = vmatpush1.msra.mxu0 %v53
    %227 = vmatprep.subr.mxu0 0.0
    %228 = vmatpush1.msra.mxu0 %v54
    %229 = vmatprep.subr.mxu0 0.0
    %230 = vmatpush1.msra.mxu0 %v55
    %231 = vmatprep.subr.mxu0 0.0
    %232 = vmatpush1.msra.mxu0 %v56
    %233 = vmatprep.subr.mxu0 0.0
    %234 = vmatpush1.msra.mxu0 %v57
    %235 = vmatprep.subr.mxu0 0.0
    %236 = vmatpush1.msra.mxu0 %v58
    %237 = vmatprep.subr.mxu0 0.0
    %238 = vmatpush1.msra.mxu0 0.0
    %239 = vmatprep.subr.mxu0 0.0
    %240 = vmatpush1.msra.mxu0 0.0
    %241 = vmatprep.subr.mxu0 0.0
    %242 = vmatpush1.msra.mxu0 0.0
    %243 = vmatprep.subr.mxu0 0.0
    %244 = vmatpush1.msra.mxu0 0.0
    %245 = vmatprep.subr.mxu0 0.0
    %246 = vmatpush1.msra.mxu0 0.0
    %247 = vmatprep.subr.mxu0 0.0
    %248 = vmatpush1.msra.mxu0 0.0
    %249 = vmatprep.subr.mxu0 0.0
    %250 = vmatpush1.msra.mxu0 0.0
    %251 = vmatprep.subr.mxu0 0.0
    %252 = vmatpush1.msra.mxu0 0.0
    %253 = vmatprep.subr.mxu0 0.0
    %254 = vmatpush1.msra.mxu0 0.0
    %255 = vmatprep.subr.mxu0 0.0
    %256 = vmatpush1.msra.mxu0 0.0
    %257 = vmatprep.subr.mxu0 0.0
    %258 = vmatpush1.msra.mxu0 0.0
    %259 = vmatprep.subr.mxu0 0.0
    %260 = vmatpush1.msra.mxu0 0.0
    %261 = vmatprep.subr.mxu0 0.0
    %262 = vmatpush1.msra.mxu0 0.0
    %263 = vmatprep.subr.mxu0 0.0
    %264 = vmatpush1.msra.mxu0 0.0
    %265 = vmatprep.subr.mxu0 0.0
    %266 = vmatpush1.msra.mxu0 0.0
    %267 = vmatprep.subr.mxu0 0.0
    %268 = vmatpush1.msra.mxu0 0.0
    %269 = vmatprep.mubr.f32.mxu0 0.0
    %270 = vmatmul.mubr.f32.gmra.mrb[0].mxu0 %v204
    %v271 = vpop.f32.mrb[0].mxu0
    %v272 = vadd.f32 0.0, %v271
    %v273 = vpop.f32.mrb[0].mxu0
    %274 = vdwg.mxu0
    %275 = vst.msk [vmem:[%s2] sm:$0xff] %vm59, %v272
    // Predicated region
    $region14: #{noisy_dqn_forward.1} parent=1 // pred_check
      _
    $region15: #{noisy_dqn_forward.1} parent=1 // pred_check_branch
      %277 = sbr.rel (0) target = $region17
    $region16: #{noisy_dqn_forward.1} parent=1 // pred_region
      _
    $region17: #{noisy_dqn_forward.1} parent=1 // pred_fallthru
      _
    // Predicated region
    $region18: #{noisy_dqn_forward.1} parent=1 // pred_check
      _
    $region19: #{noisy_dqn_forward.1} parent=1 // pred_check_branch
      %279 = sbr.rel (0) target = $region21
    $region20: #{noisy_dqn_forward.1} parent=1 // pred_region
      _
    $region21: #{noisy_dqn_forward.1} parent=1 // pred_fallthru
      _
    %280 = vsyncpa [#allocation3], 1

</llo_original>
